<compile_context>
chip_gen: v6e
topology: v6e:2x2x1
jax: 0.10.0
libtpu: 0.0.40
codegen_flags: <defaults>
</compile_context>

<pallas_src>
import functools

import jax
import jax.numpy as jnp
from jax.experimental import pallas as pl
from jax.experimental.pallas import tpu as pltpu

IN_FEATURES = 784
HIDDEN = 256
OUT_FEATURES = 10

K_PAD = 896    # 7 * 128, lane-aligned contraction dim for fc1
N_PAD = 128    # lane-dense output width (real logits occupy [:, :10])


def _round_up(x, m):
    return ((x + m - 1) // m) * m


def _mlp_kernel(x_ref, w1_ref, b1_ref, w2_ref, b2_ref, o_ref):
    # fc1: (TB, K_PAD) @ (K_PAD, H) -> f32 accumulate on MXU, bias + ReLU on VPU.
    h = jnp.dot(x_ref[...], w1_ref[...], preferred_element_type=jnp.float32)
    h = jnp.maximum(h + b1_ref[...], 0.0)
    # fc2: cast hidden to bf16 for the second MXU pass, accumulate in f32.
    y = jnp.dot(h.astype(jnp.bfloat16), w2_ref[...],
                preferred_element_type=jnp.float32)
    o_ref[...] = (y + b2_ref[...]).astype(o_ref.dtype)


@functools.partial(jax.jit, static_argnames=("tb",))
def neural_network_classifier_forward(x, w1_t, b1, w2_t, b2, *, tb=512):
    """x: (B, ...) flattening to 784 features; returns (B, 10) logits (f32)."""
    B = x.shape[0]
    x_flat = x.reshape(B, -1).astype(jnp.float32)
    K = x_flat.shape[1]                      # 784
    H = w1_t.shape[1]                        # 256
    N = w2_t.shape[1]                        # 10

    # Batch tile: VMEM-budgeted for v7x (64 MiB/TC). TB=512 bf16 rows of 896
    # cols = ~0.9 MiB/tile; double-buffered inputs + resident weights << limit.
    TB = min(tb, _round_up(B, 8))
    B_pad = _round_up(B, TB)

    # Zero-pad K (784 -> 896), batch (B -> B_pad), output width (10 -> 128).
    x_p = jnp.pad(x_flat, ((0, B_pad - B), (0, K_PAD - K))).astype(jnp.bfloat16)
    w1_p = jnp.pad(w1_t.astype(jnp.float32),
                   ((0, K_PAD - K), (0, 0))).astype(jnp.bfloat16)
    w2_p = jnp.pad(w2_t.astype(jnp.float32),
                   ((0, 0), (0, N_PAD - N))).astype(jnp.bfloat16)
    b1_row = b1.reshape(1, H).astype(jnp.float32)
    b2_row = jnp.pad(b2.astype(jnp.float32), (0, N_PAD - N)).reshape(1, N_PAD)

    grid = (B_pad // TB,)

    cost = pl.CostEstimate(
        flops=2 * B_pad * (K_PAD * H + H * N_PAD),
        transcendentals=0,
        bytes_accessed=(x_p.size * 2 + w1_p.size * 2 + w2_p.size * 2
                        + b1_row.size * 4 + b2_row.size * 4
                        + B_pad * N_PAD * 4),
    )

    out = pl.pallas_call(
        _mlp_kernel,
        out_shape=jax.ShapeDtypeStruct((B_pad, N_PAD), jnp.float32),
        grid_spec=pltpu.PrefetchScalarGridSpec(
            num_scalar_prefetch=0,
            grid=grid,
            in_specs=[
                pl.BlockSpec((TB, K_PAD), lambda i: (i, 0)),   # x batch tile
                pl.BlockSpec((K_PAD, H), lambda i: (0, 0)),    # W1 (resident)
                pl.BlockSpec((1, H), lambda i: (0, 0)),        # b1 (resident)
                pl.BlockSpec((H, N_PAD), lambda i: (0, 0)),    # W2 (resident)
                pl.BlockSpec((1, N_PAD), lambda i: (0, 0)),    # b2 (resident)
            ],
            out_specs=pl.BlockSpec((TB, N_PAD), lambda i: (i, 0)),
        ),
        compiler_params=pltpu.CompilerParams(
            dimension_semantics=("parallel",)),
        cost_estimate=cost,
    )(x_p, w1_p, b1_row, w2_p, b2_row)

    return out[:B, :N]


def init_params(key):
    """Deterministic init mimicking nn.Linear uniform(-1/sqrt(fan_in), +...)."""
    k1w, k1b, k2w, k2b = jax.random.split(key, 4)
    bound1 = 1.0 / jnp.sqrt(IN_FEATURES)
    bound2 = 1.0 / jnp.sqrt(HIDDEN)
    # torch stores weight as (out, in); keep transposed (in, out) copies.
    w1 = jax.random.uniform(k1w, (HIDDEN, IN_FEATURES),
                            minval=-bound1, maxval=bound1, dtype=jnp.float32)
    b1 = jax.random.uniform(k1b, (HIDDEN,),
                            minval=-bound1, maxval=bound1, dtype=jnp.float32)
    w2 = jax.random.uniform(k2w, (OUT_FEATURES, HIDDEN),
                            minval=-bound2, maxval=bound2, dtype=jnp.float32)
    b2 = jax.random.uniform(k2b, (OUT_FEATURES,),
                            minval=-bound2, maxval=bound2, dtype=jnp.float32)
    return w1.T, b1, w2.T, b2   # (784,256), (256,), (256,10), (10,)


if __name__ == "__main__":
    key = jax.random.PRNGKey(0)
    k_x, k_p = jax.random.split(key)

    # Small MNIST-like batch: (B, 1, 28, 28) -> flattens to (B, 784).
    x = jax.random.normal(k_x, (8, 1, 28, 28), dtype=jnp.float32)
    w1_t, b1, w2_t, b2 = init_params(k_p)

    y = neural_network_classifier_forward(x, w1_t, b1, w2_t, b2)
    y = jax.block_until_ready(y)
    assert y.shape == (8, OUT_FEATURES)

    # Reference (plain JAX) with the same bf16 rounding of inputs/weights and
    # f32 accumulation, to validate the kernel logic tightly.
    xf = x.reshape(8, -1).astype(jnp.bfloat16).astype(jnp.float32)
    w1f = w1_t.astype(jnp.bfloat16).astype(jnp.float32)
    w2f = w2_t.astype(jnp.bfloat16).astype(jnp.float32)
    h_ref = jnp.maximum(xf @ w1f + b1[None, :], 0.0)
    h_ref = h_ref.astype(jnp.bfloat16).astype(jnp.float32)
    y_ref = h_ref @ w2f + b2[None, :]
    assert jnp.allclose(y, y_ref, atol=1e-2, rtol=1e-2), (
        float(jnp.max(jnp.abs(y - y_ref))))

    print("KERNEL_OK")
</pallas_src>

<mosaic_0001>
module attributes {stable_mosaic.version = 11 : i64} {
  func.func @_mlp_kernel(%arg0: i32, %arg1: memref<8x896xbf16, #tpu.memory_space<vmem>>, %arg2: memref<896x256xbf16, #tpu.memory_space<vmem>>, %arg3: memref<1x256xf32, #tpu.memory_space<vmem>>, %arg4: memref<256x128xbf16, #tpu.memory_space<vmem>>, %arg5: memref<1x128xf32, #tpu.memory_space<vmem>>, %arg6: memref<8x128xf32, #tpu.memory_space<vmem>>) attributes {dimension_semantics = [#tpu.dimension_semantics<parallel>], iteration_bounds = array<i64: 1>, scalar_prefetch = 0 : i64, scratch_operands = 0 : i64, tpu.core_type = #tpu.core_type<tc>, window_params = [{transform_indices = @transform_0, window_bounds = array<i64: 8, 896>}, {pipeline_mode = #tpu.pipeline_mode<synchronous>, transform_indices = @transform_1, window_bounds = array<i64: 896, 256>}, {pipeline_mode = #tpu.pipeline_mode<synchronous>, transform_indices = @transform_2, window_bounds = array<i64: 1, 256>}, {pipeline_mode = #tpu.pipeline_mode<synchronous>, transform_indices = @transform_3, window_bounds = array<i64: 256, 128>}, {pipeline_mode = #tpu.pipeline_mode<synchronous>, transform_indices = @transform_4, window_bounds = array<i64: 1, 128>}, {transform_indices = @transform_5, window_bounds = array<i64: 8, 128>}]} {
    %c0 = arith.constant 0 : index
    %c0_0 = arith.constant 0 : index
    %0 = vector.load %arg1[%c0, %c0_0] : memref<8x896xbf16, #tpu.memory_space<vmem>>, vector<8x896xbf16>
    %c0_1 = arith.constant 0 : index
    %c0_2 = arith.constant 0 : index
    %1 = vector.load %arg2[%c0_1, %c0_2] : memref<896x256xbf16, #tpu.memory_space<vmem>>, vector<896x256xbf16>
    %cst = arith.constant dense<0.000000e+00> : vector<8x256xf32>
    %2 = tpu.matmul %0, %1, %cst {dimension_numbers = #tpu.dot_dimension_numbers<[1], [0], [0], [1], [0, 0, 1, 1], [], []>} : vector<8x896xbf16>, vector<896x256xbf16>, vector<8x256xf32> -> vector<8x256xf32>
    %c0_3 = arith.constant 0 : index
    %c0_4 = arith.constant 0 : index
    %3 = vector.load %arg3[%c0_3, %c0_4] : memref<1x256xf32, #tpu.memory_space<vmem>>, vector<1x256xf32>
    %4 = vector.broadcast %3 : vector<1x256xf32> to vector<8x256xf32>
    %5 = arith.addf %2, %4 : vector<8x256xf32>
    %cst_5 = arith.constant 0.000000e+00 : f32
    %6 = vector.broadcast %cst_5 : f32 to vector<8x256xf32>
    %7 = arith.maximumf %5, %6 : vector<8x256xf32>
    %8 = arith.truncf %7 : vector<8x256xf32> to vector<8x256xbf16>
    %c0_6 = arith.constant 0 : index
    %c0_7 = arith.constant 0 : index
    %9 = vector.load %arg4[%c0_6, %c0_7] : memref<256x128xbf16, #tpu.memory_space<vmem>>, vector<256x128xbf16>
    %cst_8 = arith.constant dense<0.000000e+00> : vector<8x128xf32>
    %10 = tpu.matmul %8, %9, %cst_8 {dimension_numbers = #tpu.dot_dimension_numbers<[1], [0], [0], [1], [0, 0, 1, 1], [], []>} : vector<8x256xbf16>, vector<256x128xbf16>, vector<8x128xf32> -> vector<8x128xf32>
    %c0_9 = arith.constant 0 : index
    %c0_10 = arith.constant 0 : index
    %11 = vector.load %arg5[%c0_9, %c0_10] : memref<1x128xf32, #tpu.memory_space<vmem>>, vector<1x128xf32>
    %12 = vector.broadcast %11 : vector<1x128xf32> to vector<8x128xf32>
    %13 = arith.addf %10, %12 : vector<8x128xf32>
    %c0_11 = arith.constant 0 : index
    %c0_12 = arith.constant 0 : index
    %14 = vector.load %arg6[%c0_11, %c0_12] : memref<8x128xf32, #tpu.memory_space<vmem>>, vector<8x128xf32>
    tpu.vector_store %arg6[%c0_11, %c0_12], %13 {strides = array<i32>} : memref<8x128xf32, #tpu.memory_space<vmem>>, vector<8x128xf32>,
    return
  }
  func.func @transform_0(%arg0: i32) -> (i32, i32) {
    %c0_i32 = arith.constant 0 : i32
    %c0_i32_0 = arith.constant 0 : i32
    return %arg0, %c0_i32 : i32, i32
  }
  func.func @transform_1(%arg0: i32) -> (i32, i32) {
    %c0_i32 = arith.constant 0 : i32
    %c0_i32_0 = arith.constant 0 : i32
    %c0_i32_1 = arith.constant 0 : i32
    return %c0_i32, %c0_i32_0 : i32, i32
  }
  func.func @transform_2(%arg0: i32) -> (i32, i32) {
    %c0_i32 = arith.constant 0 : i32
    %c0_i32_0 = arith.constant 0 : i32
    %c0_i32_1 = arith.constant 0 : i32
    return %c0_i32, %c0_i32_0 : i32, i32
  }
  func.func @transform_3(%arg0: i32) -> (i32, i32) {
    %c0_i32 = arith.constant 0 : i32
    %c0_i32_0 = arith.constant 0 : i32
    %c0_i32_1 = arith.constant 0 : i32
    return %c0_i32, %c0_i32_0 : i32, i32
  }
  func.func @transform_4(%arg0: i32) -> (i32, i32) {
    %c0_i32 = arith.constant 0 : i32
    %c0_i32_0 = arith.constant 0 : i32
    %c0_i32_1 = arith.constant 0 : i32
    return %c0_i32, %c0_i32_0 : i32, i32
  }
  func.func @transform_5(%arg0: i32) -> (i32, i32) {
    %c0_i32 = arith.constant 0 : i32
    %c0_i32_0 = arith.constant 0 : i32
    return %arg0, %c0_i32 : i32, i32
  }
}

</mosaic_0001>

<llo_original>
// kernel: neural_network_classifier_forward.1
$region0: #{neural_network_classifier_forward.1}
  #allocation0 [shape = 'u32[]', space=smem, size = 0x4, offset = 0x4, fixed_abs, tag = 'smem constant byte address 0x4 - core index']
  #allocation1 [shape = 'u32[144,128]{1,0:T(1,128)}', space=vmem, size = 0x12000, scoped, tag = 'internal scratch']
  %s0 = inlined_call_operand.vmem [shape: bf16[8,896], index: 0, kind: input, shape index: {}]
  %s1 = inlined_call_operand.vmem [shape: bf16[896,256], index: 1, kind: input, shape index: {}]
  %s2 = inlined_call_operand.vmem [shape: f32[1,256], index: 2, kind: input, shape index: {}]
  %s3 = inlined_call_operand.vmem [shape: bf16[256,128], index: 3, kind: input, shape index: {}]
  %s4 = inlined_call_operand.vmem [shape: f32[1,128], index: 4, kind: input, shape index: {}]
  %s5 = inlined_call_operand.hbm [shape: f32[8,128], index: 5, kind: output, shape index: {}]
  %s6 = sld [smem:[#allocation0]]
  $region30: #{neural_network_classifier_forward.1} parent=0
    _
  %s8 = ssub.s32 1, %s6
  %s9 = scalar_select 0, %s8, %s6
  $region1: #{neural_network_classifier_forward.1} parent=0
    #allocation2 [shape = 'u8[4096]{0}', space=vmem, size = 0x1000, scoped, tag = 'output window, operand 0, single buffered']
    #allocation3 [shape = 's32[1]{0}', space=sflag, size = 0x4, scoped, tag = 'scoped memory for neural_network_classifier_forward.1']
    %10 = vsyncpa [#allocation3], 0
    // Predicated region
    $region2: #{neural_network_classifier_forward.1} parent=1 // pred_check
      _
    $region3: #{neural_network_classifier_forward.1} parent=1 // pred_check_branch
      %12 = sbr.rel (0) target = $region5
    $region4: #{neural_network_classifier_forward.1} parent=1 // pred_region
      _
    $region5: #{neural_network_classifier_forward.1} parent=1 // pred_fallthru
      _
    // Predicated region
    $region6: #{neural_network_classifier_forward.1} parent=1 // pred_check
      _
    $region7: #{neural_network_classifier_forward.1} parent=1 // pred_check_branch
      %14 = sbr.rel (0) target = $region9
    $region8: #{neural_network_classifier_forward.1} parent=1 // pred_region
      _
    $region9: #{neural_network_classifier_forward.1} parent=1 // pred_fallthru
      _
    // Predicated region
    $region10: #{neural_network_classifier_forward.1} parent=1 // pred_check
      _
    $region11: #{neural_network_classifier_forward.1} parent=1 // pred_check_branch
      %16 = sbr.rel (0) target = $region13
    $region12: #{neural_network_classifier_forward.1} parent=1 // pred_region
      _
    $region13: #{neural_network_classifier_forward.1} parent=1 // pred_fallthru
      _
    // Predicated region
    $region14: #{neural_network_classifier_forward.1} parent=1 // pred_check
      _
    $region15: #{neural_network_classifier_forward.1} parent=1 // pred_check_branch
      %18 = sbr.rel (0) target = $region17
    $region16: #{neural_network_classifier_forward.1} parent=1 // pred_region
      _
    $region17: #{neural_network_classifier_forward.1} parent=1 // pred_fallthru
      _
    // Predicated region
    $region18: #{neural_network_classifier_forward.1} parent=1 // pred_check
      _
    $region19: #{neural_network_classifier_forward.1} parent=1 // pred_check_branch
      %20 = sbr.rel (0) target = $region21
    $region20: #{neural_network_classifier_forward.1} parent=1 // pred_region
      _
    $region21: #{neural_network_classifier_forward.1} parent=1 // pred_fallthru
      _
    %v22 = vld [vmem:[%s0] sm:$0xff]
    %v23 = vld [vmem:[%s0 + $0x8] sm:$0xff]
    %v24 = vld [vmem:[%s0 + $0x10] sm:$0xff]
    %v25 = vld [vmem:[%s0 + $0x18] sm:$0xf]
    %v26 = vld [vmem:[%s1] sm:$0xff]
    %v27 = vld [vmem:[%s1 + $0x8] sm:$0xff]
    %v28 = vld [vmem:[%s1 + $0x10] sm:$0xff]
    %v29 = vld [vmem:[%s1 + $0x18] sm:$0xff]
    %v30 = vld [vmem:[%s1 + $0x20] sm:$0xff]
    %v31 = vld [vmem:[%s1 + $0x28] sm:$0xff]
    %v32 = vld [vmem:[%s1 + $0x30] sm:$0xff]
    %v33 = vld [vmem:[%s1 + $0x38] sm:$0xff]
    %v34 = vld [vmem:[%s1 + $0x40] sm:$0xff]
    %v35 = vld [vmem:[%s1 + $0x48] sm:$0xff]
    %v36 = vld [vmem:[%s1 + $0x50] sm:$0xff]
    %v37 = vld [vmem:[%s1 + $0x58] sm:$0xff]
    %v38 = vld [vmem:[%s1 + $0x60] sm:$0xff]
    %v39 = vld [vmem:[%s1 + $0x68] sm:$0xff]
    %v40 = vld [vmem:[%s1 + $0x70] sm:$0xff]
    %v41 = vld [vmem:[%s1 + $0x78] sm:$0xff]
    %v42 = vld [vmem:[%s1 + $0x80] sm:$0xff]
    %v43 = vld [vmem:[%s1 + $0x88] sm:$0xff]
    %v44 = vld [vmem:[%s1 + $0x90] sm:$0xff]
    %v45 = vld [vmem:[%s1 + $0x98] sm:$0xff]
    %v46 = vld [vmem:[%s1 + $0xa0] sm:$0xff]
    %v47 = vld [vmem:[%s1 + $0xa8] sm:$0xff]
    %v48 = vld [vmem:[%s1 + $0xb0] sm:$0xff]
    %v49 = vld [vmem:[%s1 + $0xb8] sm:$0xff]
    %v50 = vld [vmem:[%s1 + $0xc0] sm:$0xff]
    %v51 = vld [vmem:[%s1 + $0xc8] sm:$0xff]
    %v52 = vld [vmem:[%s1 + $0xd0] sm:$0xff]
    %v53 = vld [vmem:[%s1 + $0xd8] sm:$0xff]
    %v54 = vld [vmem:[%s1 + $0xe0] sm:$0xff]
    %v55 = vld [vmem:[%s1 + $0xe8] sm:$0xff]
    %v56 = vld [vmem:[%s1 + $0xf0] sm:$0xff]
    %v57 = vld [vmem:[%s1 + $0xf8] sm:$0xff]
    %v58 = vld [vmem:[%s1 + $0x100] sm:$0xff]
    %v59 = vld [vmem:[%s1 + $0x108] sm:$0xff]
    %v60 = vld [vmem:[%s1 + $0x110] sm:$0xff]
    %v61 = vld [vmem:[%s1 + $0x118] sm:$0xff]
    %v62 = vld [vmem:[%s1 + $0x120] sm:$0xff]
    %v63 = vld [vmem:[%s1 + $0x128] sm:$0xff]
    %v64 = vld [vmem:[%s1 + $0x130] sm:$0xff]
    %v65 = vld [vmem:[%s1 + $0x138] sm:$0xff]
    %v66 = vld [vmem:[%s1 + $0x140] sm:$0xff]
    %v67 = vld [vmem:[%s1 + $0x148] sm:$0xff]
    %v68 = vld [vmem:[%s1 + $0x150] sm:$0xff]
    %v69 = vld [vmem:[%s1 + $0x158] sm:$0xff]
    %v70 = vld [vmem:[%s1 + $0x160] sm:$0xff]
    %v71 = vld [vmem:[%s1 + $0x168] sm:$0xff]
    %v72 = vld [vmem:[%s1 + $0x170] sm:$0xff]
    %v73 = vld [vmem:[%s1 + $0x178] sm:$0xff]
    %v74 = vld [vmem:[%s1 + $0x180] sm:$0xff]
    %v75 = vld [vmem:[%s1 + $0x188] sm:$0xff]
    %v76 = vld [vmem:[%s1 + $0x190] sm:$0xff]
    %v77 = vld [vmem:[%s1 + $0x198] sm:$0xff]
    %v78 = vld [vmem:[%s1 + $0x1a0] sm:$0xff]
    %v79 = vld [vmem:[%s1 + $0x1a8] sm:$0xff]
    %v80 = vld [vmem:[%s1 + $0x1b0] sm:$0xff]
    %v81 = vld [vmem:[%s1 + $0x1b8] sm:$0xff]
    %v82 = vld [vmem:[%s1 + $0x1c0] sm:$0xff]
    %v83 = vld [vmem:[%s1 + $0x1c8] sm:$0xff]
    %v84 = vld [vmem:[%s1 + $0x1d0] sm:$0xff]
    %v85 = vld [vmem:[%s1 + $0x1d8] sm:$0xff]
    %v86 = vld [vmem:[%s1 + $0x1e0] sm:$0xff]
    %v87 = vld [vmem:[%s1 + $0x1e8] sm:$0xff]
    %v88 = vld [vmem:[%s1 + $0x1f0] sm:$0xff]
    %v89 = vld [vmem:[%s1 + $0x1f8] sm:$0xff]
    %v90 = vld [vmem:[%s1 + $0x200] sm:$0xff]
    %v91 = vld [vmem:[%s1 + $0x208] sm:$0xff]
    %v92 = vld [vmem:[%s1 + $0x210] sm:$0xff]
    %v93 = vld [vmem:[%s1 + $0x218] sm:$0xff]
    %v94 = vld [vmem:[%s1 + $0x220] sm:$0xff]
    %v95 = vld [vmem:[%s1 + $0x228] sm:$0xff]
    %v96 = vld [vmem:[%s1 + $0x230] sm:$0xff]
    %v97 = vld [vmem:[%s1 + $0x238] sm:$0xff]
    %v98 = vld [vmem:[%s1 + $0x240] sm:$0xff]
    %v99 = vld [vmem:[%s1 + $0x248] sm:$0xff]
    %v100 = vld [vmem:[%s1 + $0x250] sm:$0xff]
    %v101 = vld [vmem:[%s1 + $0x258] sm:$0xff]
    %v102 = vld [vmem:[%s1 + $0x260] sm:$0xff]
    %v103 = vld [vmem:[%s1 + $0x268] sm:$0xff]
    %v104 = vld [vmem:[%s1 + $0x270] sm:$0xff]
    %v105 = vld [vmem:[%s1 + $0x278] sm:$0xff]
    %v106 = vld [vmem:[%s1 + $0x280] sm:$0xff]
    %v107 = vld [vmem:[%s1 + $0x288] sm:$0xff]
    %v108 = vld [vmem:[%s1 + $0x290] sm:$0xff]
    %v109 = vld [vmem:[%s1 + $0x298] sm:$0xff]
    %v110 = vld [vmem:[%s1 + $0x2a0] sm:$0xff]
    %v111 = vld [vmem:[%s1 + $0x2a8] sm:$0xff]
    %v112 = vld [vmem:[%s1 + $0x2b0] sm:$0xff]
    %v113 = vld [vmem:[%s1 + $0x2b8] sm:$0xff]
    %v114 = vld [vmem:[%s1 + $0x2c0] sm:$0xff]
    %v115 = vld [vmem:[%s1 + $0x2c8] sm:$0xff]
    %v116 = vld [vmem:[%s1 + $0x2d0] sm:$0xff]
    %v117 = vld [vmem:[%s1 + $0x2d8] sm:$0xff]
    %v118 = vld [vmem:[%s1 + $0x2e0] sm:$0xff]
    %v119 = vld [vmem:[%s1 + $0x2e8] sm:$0xff]
    %v120 = vld [vmem:[%s1 + $0x2f0] sm:$0xff]
    %v121 = vld [vmem:[%s1 + $0x2f8] sm:$0xff]
    %v122 = vld [vmem:[%s1 + $0x300] sm:$0xff]
    %v123 = vld [vmem:[%s1 + $0x308] sm:$0xff]
    %v124 = vld [vmem:[%s1 + $0x310] sm:$0xff]
    %v125 = vld [vmem:[%s1 + $0x318] sm:$0xff]
    %v126 = vld [vmem:[%s1 + $0x320] sm:$0xff]
    %v127 = vld [vmem:[%s1 + $0x328] sm:$0xff]
    %v128 = vld [vmem:[%s1 + $0x330] sm:$0xff]
    %v129 = vld [vmem:[%s1 + $0x338] sm:$0xff]
    %v130 = vld [vmem:[%s1 + $0x340] sm:$0xff]
    %v131 = vld [vmem:[%s1 + $0x348] sm:$0xff]
    %v132 = vld [vmem:[%s1 + $0x350] sm:$0xff]
    %v133 = vld [vmem:[%s1 + $0x358] sm:$0xff]
    %v134 = vld [vmem:[%s1 + $0x360] sm:$0xff]
    %v135 = vld [vmem:[%s1 + $0x368] sm:$0xff]
    %v136 = vld [vmem:[%s1 + $0x370] sm:$0xff]
    %v137 = vld [vmem:[%s1 + $0x378] sm:$0xff]
    %v138 = vld [vmem:[%s2] sm:$0x3]
    %v140 = vlaneseq
    %v141 = vshrl.u32 %v140, 7
    %v142 = vsub.s32 0, %v141
    %v143 = vrot.slane %v138, %v142
    %v144 = vlaneseq
    %v145 = vshrl.u32 %v144, 7
    %v146 = vsub.s32 1, %v145
    %v147 = vrot.slane %v138, %v146
    %v154 = vunpack.c.l.b16 %v22
    %v155 = vunpack.c.h.b16 %v22
    %v156 = vunpack.c.l.b16 %v23
    %v157 = vunpack.c.h.b16 %v23
    %v158 = vunpack.c.l.b16 %v24
    %v159 = vunpack.c.h.b16 %v24
    %v160 = vunpack.c.l.b16 %v25
    %v161 = vpack.c.b16 %v154, %v154
    %v162 = vpack.c.b16 %v155, %v155
    %v163 = vpack.c.b16 %v156, %v156
    %v164 = vpack.c.b16 %v157, %v157
    %v165 = vpack.c.b16 %v158, %v158
    %v166 = vpack.c.b16 %v159, %v159
    %v167 = vpack.c.b16 %v160, %v160
    %v287 = vunpack.c.l.b16 %v26
    %v288 = vunpack.c.h.b16 %v26
    %v289 = vunpack.c.l.b16 %v27
    %v290 = vunpack.c.h.b16 %v27
    %v291 = vunpack.c.l.b16 %v28
    %v292 = vunpack.c.h.b16 %v28
    %v293 = vunpack.c.l.b16 %v29
    %v294 = vunpack.c.h.b16 %v29
    %v295 = vunpack.c.l.b16 %v30
    %v296 = vunpack.c.h.b16 %v30
    %v297 = vunpack.c.l.b16 %v31
    %v298 = vunpack.c.h.b16 %v31
    %v299 = vunpack.c.l.b16 %v32
    %v300 = vunpack.c.h.b16 %v32
    %v301 = vunpack.c.l.b16 %v33
    %v302 = vunpack.c.h.b16 %v33
    %v303 = vunpack.c.l.b16 %v34
    %v304 = vunpack.c.h.b16 %v34
    %v305 = vunpack.c.l.b16 %v35
    %v306 = vunpack.c.h.b16 %v35
    %v307 = vunpack.c.l.b16 %v36
    %v308 = vunpack.c.h.b16 %v36
    %v309 = vunpack.c.l.b16 %v37
    %v310 = vunpack.c.h.b16 %v37
    %v311 = vunpack.c.l.b16 %v38
    %v312 = vunpack.c.h.b16 %v38
    %v313 = vunpack.c.l.b16 %v39
    %v314 = vunpack.c.h.b16 %v39
    %v315 = vunpack.c.l.b16 %v40
    %v316 = vunpack.c.h.b16 %v40
    %v317 = vunpack.c.l.b16 %v41
    %v318 = vunpack.c.h.b16 %v41
    %v319 = vunpack.c.l.b16 %v42
    %v320 = vunpack.c.h.b16 %v42
    %v321 = vunpack.c.l.b16 %v43
    %v322 = vunpack.c.h.b16 %v43
    %v323 = vunpack.c.l.b16 %v44
    %v324 = vunpack.c.h.b16 %v44
    %v325 = vunpack.c.l.b16 %v45
    %v326 = vunpack.c.h.b16 %v45
    %v327 = vunpack.c.l.b16 %v46
    %v328 = vunpack.c.h.b16 %v46
    %v329 = vunpack.c.l.b16 %v47
    %v330 = vunpack.c.h.b16 %v47
    %v331 = vunpack.c.l.b16 %v48
    %v332 = vunpack.c.h.b16 %v48
    %v333 = vunpack.c.l.b16 %v49
    %v334 = vunpack.c.h.b16 %v49
    %v335 = vunpack.c.l.b16 %v50
    %v336 = vunpack.c.h.b16 %v50
    %v337 = vunpack.c.l.b16 %v51
    %v338 = vunpack.c.h.b16 %v51
    %v339 = vunpack.c.l.b16 %v52
    %v340 = vunpack.c.h.b16 %v52
    %v341 = vunpack.c.l.b16 %v53
    %v342 = vunpack.c.h.b16 %v53
    %v343 = vunpack.c.l.b16 %v54
    %v344 = vunpack.c.h.b16 %v54
    %v345 = vunpack.c.l.b16 %v55
    %v346 = vunpack.c.h.b16 %v55
    %v347 = vunpack.c.l.b16 %v56
    %v348 = vunpack.c.h.b16 %v56
    %v349 = vunpack.c.l.b16 %v57
    %v350 = vunpack.c.h.b16 %v57
    %v351 = vunpack.c.l.b16 %v58
    %v352 = vunpack.c.h.b16 %v58
    %v353 = vunpack.c.l.b16 %v59
    %v354 = vunpack.c.h.b16 %v59
    %v355 = vunpack.c.l.b16 %v60
    %v356 = vunpack.c.h.b16 %v60
    %v357 = vunpack.c.l.b16 %v61
    %v358 = vunpack.c.h.b16 %v61
    %v359 = vunpack.c.l.b16 %v62
    %v360 = vunpack.c.h.b16 %v62
    %v361 = vunpack.c.l.b16 %v63
    %v362 = vunpack.c.h.b16 %v63
    %v363 = vunpack.c.l.b16 %v64
    %v364 = vunpack.c.h.b16 %v64
    %v365 = vunpack.c.l.b16 %v65
    %v366 = vunpack.c.h.b16 %v65
    %v367 = vunpack.c.l.b16 %v66
    %v368 = vunpack.c.h.b16 %v66
    %v369 = vunpack.c.l.b16 %v67
    %v370 = vunpack.c.h.b16 %v67
    %v371 = vunpack.c.l.b16 %v68
    %v372 = vunpack.c.h.b16 %v68
    %v373 = vunpack.c.l.b16 %v69
    %v374 = vunpack.c.h.b16 %v69
    %v375 = vunpack.c.l.b16 %v70
    %v376 = vunpack.c.h.b16 %v70
    %v377 = vunpack.c.l.b16 %v71
    %v378 = vunpack.c.h.b16 %v71
    %v379 = vunpack.c.l.b16 %v72
    %v380 = vunpack.c.h.b16 %v72
    %v381 = vunpack.c.l.b16 %v73
    %v382 = vunpack.c.h.b16 %v73
    %v383 = vunpack.c.l.b16 %v74
    %v384 = vunpack.c.h.b16 %v74
    %v385 = vunpack.c.l.b16 %v75
    %v386 = vunpack.c.h.b16 %v75
    %v387 = vunpack.c.l.b16 %v76
    %v388 = vunpack.c.h.b16 %v76
    %v389 = vunpack.c.l.b16 %v77
    %v390 = vunpack.c.h.b16 %v77
    %v391 = vunpack.c.l.b16 %v78
    %v392 = vunpack.c.h.b16 %v78
    %v393 = vunpack.c.l.b16 %v79
    %v394 = vunpack.c.h.b16 %v79
    %v395 = vunpack.c.l.b16 %v80
    %v396 = vunpack.c.h.b16 %v80
    %v397 = vunpack.c.l.b16 %v81
    %v398 = vunpack.c.h.b16 %v81
    %v399 = vunpack.c.l.b16 %v82
    %v400 = vunpack.c.h.b16 %v82
    %v401 = vunpack.c.l.b16 %v83
    %v402 = vunpack.c.h.b16 %v83
    %v403 = vunpack.c.l.b16 %v84
    %v404 = vunpack.c.h.b16 %v84
    %v405 = vunpack.c.l.b16 %v85
    %v406 = vunpack.c.h.b16 %v85
    %v407 = vunpack.c.l.b16 %v86
    %v408 = vunpack.c.h.b16 %v86
    %v409 = vunpack.c.l.b16 %v87
    %v410 = vunpack.c.h.b16 %v87
    %v411 = vunpack.c.l.b16 %v88
    %v412 = vunpack.c.h.b16 %v88
    %v413 = vunpack.c.l.b16 %v89
    %v414 = vunpack.c.h.b16 %v89
    %v415 = vunpack.c.l.b16 %v90
    %v416 = vunpack.c.h.b16 %v90
    %v417 = vunpack.c.l.b16 %v91
    %v418 = vunpack.c.h.b16 %v91
    %v419 = vunpack.c.l.b16 %v92
    %v420 = vunpack.c.h.b16 %v92
    %v421 = vunpack.c.l.b16 %v93
    %v422 = vunpack.c.h.b16 %v93
    %v423 = vunpack.c.l.b16 %v94
    %v424 = vunpack.c.h.b16 %v94
    %v425 = vunpack.c.l.b16 %v95
    %v426 = vunpack.c.h.b16 %v95
    %v427 = vunpack.c.l.b16 %v96
    %v428 = vunpack.c.h.b16 %v96
    %v429 = vunpack.c.l.b16 %v97
    %v430 = vunpack.c.h.b16 %v97
    %v431 = vunpack.c.l.b16 %v98
    %v432 = vunpack.c.h.b16 %v98
    %v433 = vunpack.c.l.b16 %v99
    %v434 = vunpack.c.h.b16 %v99
    %v435 = vunpack.c.l.b16 %v100
    %v436 = vunpack.c.h.b16 %v100
    %v437 = vunpack.c.l.b16 %v101
    %v438 = vunpack.c.h.b16 %v101
    %v439 = vunpack.c.l.b16 %v102
    %v440 = vunpack.c.h.b16 %v102
    %v441 = vunpack.c.l.b16 %v103
    %v442 = vunpack.c.h.b16 %v103
    %v443 = vunpack.c.l.b16 %v104
    %v444 = vunpack.c.h.b16 %v104
    %v445 = vunpack.c.l.b16 %v105
    %v446 = vunpack.c.h.b16 %v105
    %v447 = vunpack.c.l.b16 %v106
    %v448 = vunpack.c.h.b16 %v106
    %v449 = vunpack.c.l.b16 %v107
    %v450 = vunpack.c.h.b16 %v107
    %v451 = vunpack.c.l.b16 %v108
    %v452 = vunpack.c.h.b16 %v108
    %v453 = vunpack.c.l.b16 %v109
    %v454 = vunpack.c.h.b16 %v109
    %v455 = vunpack.c.l.b16 %v110
    %v456 = vunpack.c.h.b16 %v110
    %v457 = vunpack.c.l.b16 %v111
    %v458 = vunpack.c.h.b16 %v111
    %v459 = vunpack.c.l.b16 %v112
    %v460 = vunpack.c.h.b16 %v112
    %v461 = vunpack.c.l.b16 %v113
    %v462 = vunpack.c.h.b16 %v113
    %v463 = vunpack.c.l.b16 %v114
    %v464 = vunpack.c.h.b16 %v114
    %v465 = vunpack.c.l.b16 %v115
    %v466 = vunpack.c.h.b16 %v115
    %v467 = vunpack.c.l.b16 %v116
    %v468 = vunpack.c.h.b16 %v116
    %v469 = vunpack.c.l.b16 %v117
    %v470 = vunpack.c.h.b16 %v117
    %v471 = vunpack.c.l.b16 %v118
    %v472 = vunpack.c.h.b16 %v118
    %v473 = vunpack.c.l.b16 %v119
    %v474 = vunpack.c.h.b16 %v119
    %v475 = vunpack.c.l.b16 %v120
    %v476 = vunpack.c.h.b16 %v120
    %v477 = vunpack.c.l.b16 %v121
    %v478 = vunpack.c.h.b16 %v121
    %v479 = vunpack.c.l.b16 %v122
    %v480 = vunpack.c.h.b16 %v122
    %v481 = vunpack.c.l.b16 %v123
    %v482 = vunpack.c.h.b16 %v123
    %v483 = vunpack.c.l.b16 %v124
    %v484 = vunpack.c.h.b16 %v124
    %v485 = vunpack.c.l.b16 %v125
    %v486 = vunpack.c.h.b16 %v125
    %v487 = vunpack.c.l.b16 %v126
    %v488 = vunpack.c.h.b16 %v126
    %v489 = vunpack.c.l.b16 %v127
    %v490 = vunpack.c.h.b16 %v127
    %v491 = vunpack.c.l.b16 %v128
    %v492 = vunpack.c.h.b16 %v128
    %v493 = vunpack.c.l.b16 %v129
    %v494 = vunpack.c.h.b16 %v129
    %v495 = vunpack.c.l.b16 %v130
    %v496 = vunpack.c.h.b16 %v130
    %v497 = vunpack.c.l.b16 %v131
    %v498 = vunpack.c.h.b16 %v131
    %v499 = vunpack.c.l.b16 %v132
    %v500 = vunpack.c.h.b16 %v132
    %v501 = vunpack.c.l.b16 %v133
    %v502 = vunpack.c.h.b16 %v133
    %v503 = vunpack.c.l.b16 %v134
    %v504 = vunpack.c.h.b16 %v134
    %v505 = vunpack.c.l.b16 %v135
    %v506 = vunpack.c.h.b16 %v135
    %v507 = vunpack.c.l.b16 %v136
    %v508 = vunpack.c.h.b16 %v136
    %v509 = vunpack.c.l.b16 %v137
    %v510 = vunpack.c.h.b16 %v137
    %v511 = vpack.c.b16 %v289, %v287
    %v512 = vpack.c.b16 %v290, %v288
    %v513 = vpack.c.b16 %v293, %v291
    %v514 = vpack.c.b16 %v294, %v292
    %v515 = vpack.c.b16 %v297, %v295
    %v516 = vpack.c.b16 %v298, %v296
    %v517 = vpack.c.b16 %v301, %v299
    %v518 = vpack.c.b16 %v302, %v300
    %v519 = vpack.c.b16 %v305, %v303
    %v520 = vpack.c.b16 %v306, %v304
    %v521 = vpack.c.b16 %v309, %v307
    %v522 = vpack.c.b16 %v310, %v308
    %v523 = vpack.c.b16 %v313, %v311
    %v524 = vpack.c.b16 %v314, %v312
    %v525 = vpack.c.b16 %v317, %v315
    %v526 = vpack.c.b16 %v318, %v316
    %v527 = vpack.c.b16 %v321, %v319
    %v528 = vpack.c.b16 %v322, %v320
    %v529 = vpack.c.b16 %v325, %v323
    %v530 = vpack.c.b16 %v326, %v324
    %v531 = vpack.c.b16 %v329, %v327
    %v532 = vpack.c.b16 %v330, %v328
    %v533 = vpack.c.b16 %v333, %v331
    %v534 = vpack.c.b16 %v334, %v332
    %v535 = vpack.c.b16 %v337, %v335
    %v536 = vpack.c.b16 %v338, %v336
    %v537 = vpack.c.b16 %v341, %v339
    %v538 = vpack.c.b16 %v342, %v340
    %v539 = vpack.c.b16 %v345, %v343
    %v540 = vpack.c.b16 %v346, %v344
    %v541 = vpack.c.b16 %v349, %v347
    %v542 = vpack.c.b16 %v350, %v348
    %v543 = vpack.c.b16 %v353, %v351
    %v544 = vpack.c.b16 %v354, %v352
    %v545 = vpack.c.b16 %v357, %v355
    %v546 = vpack.c.b16 %v358, %v356
    %v547 = vpack.c.b16 %v361, %v359
    %v548 = vpack.c.b16 %v362, %v360
    %v549 = vpack.c.b16 %v365, %v363
    %v550 = vpack.c.b16 %v366, %v364
    %v551 = vpack.c.b16 %v369, %v367
    %v552 = vpack.c.b16 %v370, %v368
    %v553 = vpack.c.b16 %v373, %v371
    %v554 = vpack.c.b16 %v374, %v372
    %v555 = vpack.c.b16 %v377, %v375
    %v556 = vpack.c.b16 %v378, %v376
    %v557 = vpack.c.b16 %v381, %v379
    %v558 = vpack.c.b16 %v382, %v380
    %v559 = vpack.c.b16 %v385, %v383
    %v560 = vpack.c.b16 %v386, %v384
    %v561 = vpack.c.b16 %v389, %v387
    %v562 = vpack.c.b16 %v390, %v388
    %v563 = vpack.c.b16 %v393, %v391
    %v564 = vpack.c.b16 %v394, %v392
    %v565 = vpack.c.b16 %v397, %v395
    %v566 = vpack.c.b16 %v398, %v396
    %v567 = vpack.c.b16 %v401, %v399
    %v568 = vpack.c.b16 %v402, %v400
    %v569 = vpack.c.b16 %v405, %v403
    %v570 = vpack.c.b16 %v406, %v404
    %v571 = vpack.c.b16 %v409, %v407
    %v572 = vpack.c.b16 %v410, %v408
    %v573 = vpack.c.b16 %v413, %v411
    %v574 = vpack.c.b16 %v414, %v412
    %v575 = vpack.c.b16 %v417, %v415
    %v576 = vpack.c.b16 %v418, %v416
    %v577 = vpack.c.b16 %v421, %v419
    %v578 = vpack.c.b16 %v422, %v420
    %v579 = vpack.c.b16 %v425, %v423
    %v580 = vpack.c.b16 %v426, %v424
    %v581 = vpack.c.b16 %v429, %v427
    %v582 = vpack.c.b16 %v430, %v428
    %v583 = vpack.c.b16 %v433, %v431
    %v584 = vpack.c.b16 %v434, %v432
    %v585 = vpack.c.b16 %v437, %v435
    %v586 = vpack.c.b16 %v438, %v436
    %v587 = vpack.c.b16 %v441, %v439
    %v588 = vpack.c.b16 %v442, %v440
    %v589 = vpack.c.b16 %v445, %v443
    %v590 = vpack.c.b16 %v446, %v444
    %v591 = vpack.c.b16 %v449, %v447
    %v592 = vpack.c.b16 %v450, %v448
    %v593 = vpack.c.b16 %v453, %v451
    %v594 = vpack.c.b16 %v454, %v452
    %v595 = vpack.c.b16 %v457, %v455
    %v596 = vpack.c.b16 %v458, %v456
    %v597 = vpack.c.b16 %v461, %v459
    %v598 = vpack.c.b16 %v462, %v460
    %v599 = vpack.c.b16 %v465, %v463
    %v600 = vpack.c.b16 %v466, %v464
    %v601 = vpack.c.b16 %v469, %v467
    %v602 = vpack.c.b16 %v470, %v468
    %v603 = vpack.c.b16 %v473, %v471
    %v604 = vpack.c.b16 %v474, %v472
    %v605 = vpack.c.b16 %v477, %v475
    %v606 = vpack.c.b16 %v478, %v476
    %v607 = vpack.c.b16 %v481, %v479
    %v608 = vpack.c.b16 %v482, %v480
    %v609 = vpack.c.b16 %v485, %v483
    %v610 = vpack.c.b16 %v486, %v484
    %v611 = vpack.c.b16 %v489, %v487
    %v612 = vpack.c.b16 %v490, %v488
    %v613 = vpack.c.b16 %v493, %v491
    %v614 = vpack.c.b16 %v494, %v492
    %v615 = vpack.c.b16 %v497, %v495
    %v616 = vpack.c.b16 %v498, %v496
    %v617 = vpack.c.b16 %v501, %v499
    %v618 = vpack.c.b16 %v502, %v500
    %v619 = vpack.c.b16 %v505, %v503
    %v620 = vpack.c.b16 %v506, %v504
    %v621 = vpack.c.b16 %v509, %v507
    %v622 = vpack.c.b16 %v510, %v508
    %735 = vmatprep.subr.bf16.mxu0 %v526
    %736 = vmatpush1.bf16.msra.mxu0 %v525
    %737 = vmatprep.subr.bf16.mxu0 %v524
    %738 = vmatpush1.bf16.msra.mxu0 %v523
    %739 = vmatprep.subr.bf16.mxu0 %v522
    %740 = vmatpush1.bf16.msra.mxu0 %v521
    %741 = vmatprep.subr.bf16.mxu0 %v520
    %742 = vmatpush1.bf16.msra.mxu0 %v519
    %743 = vmatprep.subr.bf16.mxu0 %v518
    %744 = vmatpush1.bf16.msra.mxu0 %v517
    %745 = vmatprep.subr.bf16.mxu0 %v516
    %746 = vmatpush1.bf16.msra.mxu0 %v515
    %747 = vmatprep.subr.bf16.mxu0 %v514
    %748 = vmatpush1.bf16.msra.mxu0 %v513
    %749 = vmatprep.subr.bf16.mxu0 %v512
    %750 = vmatpush1.bf16.msra.mxu0 %v511
    %751 = vmatprep.subr.bf16.mxu0 %v542
    %752 = vmatpush2.bf16.msra.mxu0 %v541
    %753 = vmatprep.subr.bf16.mxu0 %v540
    %754 = vmatpush2.bf16.msra.mxu0 %v539
    %755 = vmatprep.subr.bf16.mxu0 %v538
    %756 = vmatpush2.bf16.msra.mxu0 %v537
    %757 = vmatprep.subr.bf16.mxu0 %v536
    %758 = vmatpush2.bf16.msra.mxu0 %v535
    %759 = vmatprep.subr.bf16.mxu0 %v534
    %760 = vmatpush2.bf16.msra.mxu0 %v533
    %761 = vmatprep.subr.bf16.mxu0 %v532
    %762 = vmatpush2.bf16.msra.mxu0 %v531
    %763 = vmatprep.subr.bf16.mxu0 %v530
    %764 = vmatpush2.bf16.msra.mxu0 %v529
    %765 = vmatprep.subr.bf16.mxu0 %v528
    %766 = vmatpush2.bf16.msra.mxu0 %v527
    %767 = vmatprep.mubr.bf16.mxu0 %v162
    %768 = vmatmul.mubr.bf16.gmra.mxu0 %v161
    %v769 = vpop.f32.mrf.mxu0
    %v770 = vadd.f32 %v143, %v769
    %v771 = vpop.f32.mrf.mxu0
    %v772 = vadd.f32 %v147, %v771
    %v773 = vpop.f32.mrf.mxu0
    %v774 = vpop.f32.mrf.mxu0
    %775 = vdwg.mxu0
    %776 = vmatprep.subr.bf16.mxu0 %v558
    %777 = vmatpush1.bf16.msra.mxu0 %v557
    %778 = vmatprep.subr.bf16.mxu0 %v556
    %779 = vmatpush1.bf16.msra.mxu0 %v555
    %780 = vmatprep.subr.bf16.mxu0 %v554
    %781 = vmatpush1.bf16.msra.mxu0 %v553
    %782 = vmatprep.subr.bf16.mxu0 %v552
    %783 = vmatpush1.bf16.msra.mxu0 %v551
    %784 = vmatprep.subr.bf16.mxu0 %v550
    %785 = vmatpush1.bf16.msra.mxu0 %v549
    %786 = vmatprep.subr.bf16.mxu0 %v548
    %787 = vmatpush1.bf16.msra.mxu0 %v547
    %788 = vmatprep.subr.bf16.mxu0 %v546
    %789 = vmatpush1.bf16.msra.mxu0 %v545
    %790 = vmatprep.subr.bf16.mxu0 %v544
    %791 = vmatpush1.bf16.msra.mxu0 %v543
    %792 = vmatprep.subr.bf16.mxu0 %v574
    %793 = vmatpush2.bf16.msra.mxu0 %v573
    %794 = vmatprep.subr.bf16.mxu0 %v572
    %795 = vmatpush2.bf16.msra.mxu0 %v571
    %796 = vmatprep.subr.bf16.mxu0 %v570
    %797 = vmatpush2.bf16.msra.mxu0 %v569
    %798 = vmatprep.subr.bf16.mxu0 %v568
    %799 = vmatpush2.bf16.msra.mxu0 %v567
    %800 = vmatprep.subr.bf16.mxu0 %v566
    %801 = vmatpush2.bf16.msra.mxu0 %v565
    %802 = vmatprep.subr.bf16.mxu0 %v564
    %803 = vmatpush2.bf16.msra.mxu0 %v563
    %804 = vmatprep.subr.bf16.mxu0 %v562
    %805 = vmatpush2.bf16.msra.mxu0 %v561
    %806 = vmatprep.subr.bf16.mxu0 %v560
    %807 = vmatpush2.bf16.msra.mxu0 %v559
    %808 = vmatprep.mubr.bf16.mxu0 %v164
    %809 = vmatmul.mubr.bf16.gmra.mxu0 %v163
    %v810 = vpop.f32.mrf.mxu0
    %v811 = vadd.f32 %v770, %v810
    %v812 = vpop.f32.mrf.mxu0
    %v813 = vadd.f32 %v772, %v812
    %v814 = vpop.f32.mrf.mxu0
    %v815 = vpop.f32.mrf.mxu0
    %816 = vdwg.mxu0
    %817 = vmatprep.subr.bf16.mxu0 %v590
    %818 = vmatpush1.bf16.msra.mxu0 %v589
    %819 = vmatprep.subr.bf16.mxu0 %v588
    %820 = vmatpush1.bf16.msra.mxu0 %v587
    %821 = vmatprep.subr.bf16.mxu0 %v586
    %822 = vmatpush1.bf16.msra.mxu0 %v585
    %823 = vmatprep.subr.bf16.mxu0 %v584
    %824 = vmatpush1.bf16.msra.mxu0 %v583
    %825 = vmatprep.subr.bf16.mxu0 %v582
    %826 = vmatpush1.bf16.msra.mxu0 %v581
    %827 = vmatprep.subr.bf16.mxu0 %v580
    %828 = vmatpush1.bf16.msra.mxu0 %v579
    %829 = vmatprep.subr.bf16.mxu0 %v578
    %830 = vmatpush1.bf16.msra.mxu0 %v577
    %831 = vmatprep.subr.bf16.mxu0 %v576
    %832 = vmatpush1.bf16.msra.mxu0 %v575
    %833 = vmatprep.subr.bf16.mxu0 %v606
    %834 = vmatpush2.bf16.msra.mxu0 %v605
    %835 = vmatprep.subr.bf16.mxu0 %v604
    %836 = vmatpush2.bf16.msra.mxu0 %v603
    %837 = vmatprep.subr.bf16.mxu0 %v602
    %838 = vmatpush2.bf16.msra.mxu0 %v601
    %839 = vmatprep.subr.bf16.mxu0 %v600
    %840 = vmatpush2.bf16.msra.mxu0 %v599
    %841 = vmatprep.subr.bf16.mxu0 %v598
    %842 = vmatpush2.bf16.msra.mxu0 %v597
    %843 = vmatprep.subr.bf16.mxu0 %v596
    %844 = vmatpush2.bf16.msra.mxu0 %v595
    %845 = vmatprep.subr.bf16.mxu0 %v594
    %846 = vmatpush2.bf16.msra.mxu0 %v593
    %847 = vmatprep.subr.bf16.mxu0 %v592
    %848 = vmatpush2.bf16.msra.mxu0 %v591
    %849 = vmatprep.mubr.bf16.mxu0 %v166
    %850 = vmatmul.mubr.bf16.gmra.mxu0 %v165
    %v851 = vpop.f32.mrf.mxu0
    %v852 = vadd.f32 %v811, %v851
    %v853 = vpop.f32.mrf.mxu0
    %v854 = vadd.f32 %v813, %v853
    %v855 = vpop.f32.mrf.mxu0
    %v856 = vpop.f32.mrf.mxu0
    %857 = vdwg.mxu0
    %858 = vmatprep.subr.bf16.mxu0 %v622
    %859 = vmatpush1.bf16.msra.mxu0 %v621
    %860 = vmatprep.subr.bf16.mxu0 %v620
    %861 = vmatpush1.bf16.msra.mxu0 %v619
    %862 = vmatprep.subr.bf16.mxu0 %v618
    %863 = vmatpush1.bf16.msra.mxu0 %v617
    %864 = vmatprep.subr.bf16.mxu0 %v616
    %865 = vmatpush1.bf16.msra.mxu0 %v615
    %866 = vmatprep.subr.bf16.mxu0 %v614
    %867 = vmatpush1.bf16.msra.mxu0 %v613
    %868 = vmatprep.subr.bf16.mxu0 %v612
    %869 = vmatpush1.bf16.msra.mxu0 %v611
    %870 = vmatprep.subr.bf16.mxu0 %v610
    %871 = vmatpush1.bf16.msra.mxu0 %v609
    %872 = vmatprep.subr.bf16.mxu0 %v608
    %873 = vmatpush1.bf16.msra.mxu0 %v607
    %874 = vmatprep.subr.bf16.mxu0 0
    %875 = vmatpush2.bf16.msra.mxu0 0
    %876 = vmatprep.subr.bf16.mxu0 0
    %877 = vmatpush2.bf16.msra.mxu0 0
    %878 = vmatprep.subr.bf16.mxu0 0
    %879 = vmatpush2.bf16.msra.mxu0 0
    %880 = vmatprep.subr.bf16.mxu0 0
    %881 = vmatpush2.bf16.msra.mxu0 0
    %882 = vmatprep.subr.bf16.mxu0 0
    %883 = vmatpush2.bf16.msra.mxu0 0
    %884 = vmatprep.subr.bf16.mxu0 0
    %885 = vmatpush2.bf16.msra.mxu0 0
    %886 = vmatprep.subr.bf16.mxu0 0
    %887 = vmatpush2.bf16.msra.mxu0 0
    %888 = vmatprep.subr.bf16.mxu0 0
    %889 = vmatpush2.bf16.msra.mxu0 0
    %890 = vmatprep.mubr.bf16.mxu0 0
    %891 = vmatmul.mubr.bf16.gmra.mxu0 %v167
    %v892 = vpop.f32.mrf.mxu0
    %v893 = vadd.f32 %v852, %v892
    %v894 = vpop.f32.mrf.mxu0
    %v895 = vadd.f32 %v854, %v894
    %v896 = vpop.f32.mrf.mxu0
    %v897 = vpop.f32.mrf.mxu0
    %898 = vdwg.mxu0
    %v899 = vmax.f32 %v893, 0.0
    %v900 = vmax.f32 %v895, 0.0
    %v901 = vpack.c.bf16 %v899, %v899
    %v902 = vpack.c.bf16 %v900, %v900
    %v903 = vld [vmem:[%s3] sm:$0xf]
    %v904 = vld [vmem:[%s3 + $0x4] sm:$0xf]
    %v905 = vld [vmem:[%s3 + $0x8] sm:$0xf]
    %v906 = vld [vmem:[%s3 + $0xc] sm:$0xf]
    %v907 = vld [vmem:[%s3 + $0x10] sm:$0xf]
    %v908 = vld [vmem:[%s3 + $0x14] sm:$0xf]
    %v909 = vld [vmem:[%s3 + $0x18] sm:$0xf]
    %v910 = vld [vmem:[%s3 + $0x1c] sm:$0xf]
    %v911 = vld [vmem:[%s3 + $0x20] sm:$0xf]
    %v912 = vld [vmem:[%s3 + $0x24] sm:$0xf]
    %v913 = vld [vmem:[%s3 + $0x28] sm:$0xf]
    %v914 = vld [vmem:[%s3 + $0x2c] sm:$0xf]
    %v915 = vld [vmem:[%s3 + $0x30] sm:$0xf]
    %v916 = vld [vmem:[%s3 + $0x34] sm:$0xf]
    %v917 = vld [vmem:[%s3 + $0x38] sm:$0xf]
    %v918 = vld [vmem:[%s3 + $0x3c] sm:$0xf]
    %v919 = vld [vmem:[%s3 + $0x40] sm:$0xf]
    %v920 = vld [vmem:[%s3 + $0x44] sm:$0xf]
    %v921 = vld [vmem:[%s3 + $0x48] sm:$0xf]
    %v922 = vld [vmem:[%s3 + $0x4c] sm:$0xf]
    %v923 = vld [vmem:[%s3 + $0x50] sm:$0xf]
    %v924 = vld [vmem:[%s3 + $0x54] sm:$0xf]
    %v925 = vld [vmem:[%s3 + $0x58] sm:$0xf]
    %v926 = vld [vmem:[%s3 + $0x5c] sm:$0xf]
    %v927 = vld [vmem:[%s3 + $0x60] sm:$0xf]
    %v928 = vld [vmem:[%s3 + $0x64] sm:$0xf]
    %v929 = vld [vmem:[%s3 + $0x68] sm:$0xf]
    %v930 = vld [vmem:[%s3 + $0x6c] sm:$0xf]
    %v931 = vld [vmem:[%s3 + $0x70] sm:$0xf]
    %v932 = vld [vmem:[%s3 + $0x74] sm:$0xf]
    %v933 = vld [vmem:[%s3 + $0x78] sm:$0xf]
    %v934 = vld [vmem:[%s3 + $0x7c] sm:$0xf]
    %v935 = vld [vmem:[%s4] sm:$0x1]
    %v937 = vlaneseq
    %v938 = vshrl.u32 %v937, 7
    %v939 = vsub.s32 0, %v938
    %v940 = vrot.slane %v935, %v939
    %v974 = vunpack.c.l.b16 %v903
    %v975 = vunpack.c.l.b16 %v904
    %v976 = vunpack.c.l.b16 %v905
    %v977 = vunpack.c.l.b16 %v906
    %v978 = vunpack.c.l.b16 %v907
    %v979 = vunpack.c.l.b16 %v908
    %v980 = vunpack.c.l.b16 %v909
    %v981 = vunpack.c.l.b16 %v910
    %v982 = vunpack.c.l.b16 %v911
    %v983 = vunpack.c.l.b16 %v912
    %v984 = vunpack.c.l.b16 %v913
    %v985 = vunpack.c.l.b16 %v914
    %v986 = vunpack.c.l.b16 %v915
    %v987 = vunpack.c.l.b16 %v916
    %v988 = vunpack.c.l.b16 %v917
    %v989 = vunpack.c.l.b16 %v918
    %v990 = vunpack.c.l.b16 %v919
    %v991 = vunpack.c.l.b16 %v920
    %v992 = vunpack.c.l.b16 %v921
    %v993 = vunpack.c.l.b16 %v922
    %v994 = vunpack.c.l.b16 %v923
    %v995 = vunpack.c.l.b16 %v924
    %v996 = vunpack.c.l.b16 %v925
    %v997 = vunpack.c.l.b16 %v926
    %v998 = vunpack.c.l.b16 %v927
    %v999 = vunpack.c.l.b16 %v928
    %v1000 = vunpack.c.l.b16 %v929
    %v1001 = vunpack.c.l.b16 %v930
    %v1002 = vunpack.c.l.b16 %v931
    %v1003 = vunpack.c.l.b16 %v932
    %v1004 = vunpack.c.l.b16 %v933
    %v1005 = vunpack.c.l.b16 %v934
    %v1006 = vpack.c.b16 %v975, %v974
    %v1007 = vpack.c.b16 %v977, %v976
    %v1008 = vpack.c.b16 %v979, %v978
    %v1009 = vpack.c.b16 %v981, %v980
    %v1010 = vpack.c.b16 %v983, %v982
    %v1011 = vpack.c.b16 %v985, %v984
    %v1012 = vpack.c.b16 %v987, %v986
    %v1013 = vpack.c.b16 %v989, %v988
    %v1014 = vpack.c.b16 %v991, %v990
    %v1015 = vpack.c.b16 %v993, %v992
    %v1016 = vpack.c.b16 %v995, %v994
    %v1017 = vpack.c.b16 %v997, %v996
    %v1018 = vpack.c.b16 %v999, %v998
    %v1019 = vpack.c.b16 %v1001, %v1000
    %v1020 = vpack.c.b16 %v1003, %v1002
    %v1021 = vpack.c.b16 %v1005, %v1004
    %1038 = vmatprep.subr.bf16.mxu0 0
    %1039 = vmatpush1.bf16.msra.mxu0 %v1013
    %1040 = vmatprep.subr.bf16.mxu0 0
    %1041 = vmatpush1.bf16.msra.mxu0 %v1012
    %1042 = vmatprep.subr.bf16.mxu0 0
    %1043 = vmatpush1.bf16.msra.mxu0 %v1011
    %1044 = vmatprep.subr.bf16.mxu0 0
    %1045 = vmatpush1.bf16.msra.mxu0 %v1010
    %1046 = vmatprep.subr.bf16.mxu0 0
    %1047 = vmatpush1.bf16.msra.mxu0 %v1009
    %1048 = vmatprep.subr.bf16.mxu0 0
    %1049 = vmatpush1.bf16.msra.mxu0 %v1008
    %1050 = vmatprep.subr.bf16.mxu0 0
    %1051 = vmatpush1.bf16.msra.mxu0 %v1007
    %1052 = vmatprep.subr.bf16.mxu0 0
    %1053 = vmatpush1.bf16.msra.mxu0 %v1006
    %1054 = vmatprep.subr.bf16.mxu0 0
    %1055 = vmatpush2.bf16.msra.mxu0 %v1021
    %1056 = vmatprep.subr.bf16.mxu0 0
    %1057 = vmatpush2.bf16.msra.mxu0 %v1020
    %1058 = vmatprep.subr.bf16.mxu0 0
    %1059 = vmatpush2.bf16.msra.mxu0 %v1019
    %1060 = vmatprep.subr.bf16.mxu0 0
    %1061 = vmatpush2.bf16.msra.mxu0 %v1018
    %1062 = vmatprep.subr.bf16.mxu0 0
    %1063 = vmatpush2.bf16.msra.mxu0 %v1017
    %1064 = vmatprep.subr.bf16.mxu0 0
    %1065 = vmatpush2.bf16.msra.mxu0 %v1016
    %1066 = vmatprep.subr.bf16.mxu0 0
    %1067 = vmatpush2.bf16.msra.mxu0 %v1015
    %1068 = vmatprep.subr.bf16.mxu0 0
    %1069 = vmatpush2.bf16.msra.mxu0 %v1014
    %1070 = vmatprep.mubr.bf16.mxu0 %v902
    %1071 = vmatmul.mubr.bf16.gmra.mxu0 %v901
    %v1072 = vpop.f32.mrf.mxu0
    %v1073 = vadd.f32 %v940, %v1072
    %v1074 = vpop.f32.mrf.mxu0
    %v1075 = vpop.f32.mrf.mxu0
    %v1076 = vpop.f32.mrf.mxu0
    %1077 = vdwg.mxu0
    %1078 = vst [vmem:[#allocation2] sm:$0xff] %v1073
    // Predicated region
    $region22: #{neural_network_classifier_forward.1} parent=1 // pred_check
      _
    $region23: #{neural_network_classifier_forward.1} parent=1 // pred_check_branch
      %1080 = sbr.rel (0) target = $region25
    $region24: #{neural_network_classifier_forward.1} parent=1 // pred_region
      %s1082 = ssub.s32 128, 128
      %1083 = vsyncadd [#allocation3], %s1082
      %s1085 = sshll.u32 [#allocation2], 4
      %s1086 = int_to_ptr.vmem [resolvable:$true] %s1085
      %1088 = dma.vmem_to_hbm [thread:$0]  %s1086, 128, %s5, [#allocation3]
    $region25: #{neural_network_classifier_forward.1} parent=1 // pred_fallthru
      _
    // Predicated region
    $region26: #{neural_network_classifier_forward.1} parent=1 // pred_check
      _
    $region27: #{neural_network_classifier_forward.1} parent=1 // pred_check_branch
      %1090 = sbr.rel (0) target = $region29
    $region28: #{neural_network_classifier_forward.1} parent=1 // pred_region
      %1091 = dma.done [#allocation3], 128
    $region29: #{neural_network_classifier_forward.1} parent=1 // pred_fallthru
      _
    %1092 = vsyncpa [#allocation3], 1

</llo_original>
